<compile_context>
chip_gen: v7x
topology: tpu7x:2x2x1
jax: 0.10.0
libtpu: 0.0.40
codegen_flags: <defaults>
</compile_context>

<pallas_src>
import functools

import jax
import jax.numpy as jnp
from jax import lax
from jax.experimental import pallas as pl
from jax.experimental.pallas import tpu as pltpu

LANES = 128
MAX_TILE_R = 4096                     # 4096*128*4B = 2 MiB per input block
MIN_PALLAS_ELEMS = 64 * 1024          # below this, fused XLA wins


def _stable_bce(x, y):
    """Elementwise BCE(sigmoid(x), y), numerically stable, torch-clamp compatible.

      -log(sigmoid(x))     = softplus(-x) = relu(x) - x + log1p(exp(-|x|))
      -log(1 - sigmoid(x)) = softplus( x) = relu(x)     + log1p(exp(-|x|))
    torch clamps the log terms at -100  =>  clamp the softplus terms at 100.
    """
    s = jnp.log1p(jnp.exp(-jnp.abs(x)))
    relu_x = jnp.maximum(x, 0.0)
    sp_pos = jnp.minimum(relu_x + s, 100.0)        # -log(1 - p)
    sp_neg = jnp.minimum(relu_x - x + s, 100.0)    # -log(p)
    # y*sp_neg + (1-y)*sp_pos, with one fewer multiply:
    return sp_pos + y * (sp_neg - sp_pos)


def _bce_sum_kernel(x_ref, y_ref, out_ref, *, tile_r, n_blocks, total, needs_mask):
    i = pl.program_id(0)

    @pl.when(i == 0)
    def _():
        out_ref[...] = jnp.zeros_like(out_ref)

    x = x_ref[...].astype(jnp.float32)
    y = y_ref[...].astype(jnp.float32)
    loss = _stable_bce(x, y)

    def fold(l):
        # Fold the tile down to one (8, 128) vreg of partial sums (VALU-only).
        if tile_r > 8:
            return l.reshape(tile_r // 8, 8, LANES).sum(axis=0)
        return l

    if needs_mask:
        # Only the LAST block contains invalid positions (edge-block garbage
        # and/or the <=127-element host pad): gate the mask work onto it.
        is_tail = i == (n_blocks - 1)

        @pl.when(jnp.logical_not(is_tail))
        def _():
            out_ref[...] += fold(loss)

        @pl.when(is_tail)
        def _():
            row = lax.broadcasted_iota(jnp.int32, (tile_r, LANES), 0)
            col = lax.broadcasted_iota(jnp.int32, (tile_r, LANES), 1)
            flat_idx = i * (tile_r * LANES) + row * LANES + col
            # Must stay a SELECT (not a multiply): OOB reads are garbage.
            out_ref[...] += fold(jnp.where(flat_idx < total, loss, 0.0))
    else:
        out_ref[...] += fold(loss)


def map_cross_entropy_loss(map_x, map_s_gt, scaler=0.5, *,
                           min_pallas_elems=MIN_PALLAS_ELEMS):
    assert map_x.shape == map_s_gt.shape
    total = int(map_x.size)

    # Small-input fast path: XLA's fused elementwise+reduce beats kernel launch
    # + grid overhead for tiny tensors (and tensors with < 8 lane-rows).
    if total < max(min_pallas_elems, 8 * LANES):
        x = map_x.astype(jnp.float32)
        y = map_s_gt.astype(jnp.float32)
        return jnp.mean(_stable_bce(x, y)) * scaler

    n_rows = pl.cdiv(total, LANES)          # lane-dense rows
    if n_rows >= MAX_TILE_R:
        tile_r = MAX_TILE_R
    else:
        tile_r = (n_rows // 8) * 8          # multiple of 8, <= n_rows
    n_blocks = pl.cdiv(n_rows, tile_r)

    # Grid coverage vs. real data: only mask when the last block is ragged.
    needs_mask = (n_blocks * tile_r * LANES) != total

    # Free reshape into a lane-dense slab; pad only the sub-128 tail (<=127
    # elements) when total is not lane-aligned. Never pad by whole tiles.
    x_flat = map_x.reshape(-1)
    y_flat = map_s_gt.reshape(-1)
    lane_pad = n_rows * LANES - total
    if lane_pad:
        x_flat = jnp.pad(x_flat, (0, lane_pad))
        y_flat = jnp.pad(y_flat, (0, lane_pad))
    x2 = x_flat.reshape(n_rows, LANES)
    y2 = y_flat.reshape(n_rows, LANES)

    kernel = functools.partial(
        _bce_sum_kernel,
        tile_r=tile_r,
        n_blocks=n_blocks,
        total=total,
        needs_mask=needs_mask,
    )

    partials = pl.pallas_call(
        kernel,
        out_shape=jax.ShapeDtypeStruct((8, LANES), jnp.float32),
        grid_spec=pltpu.PrefetchScalarGridSpec(
            num_scalar_prefetch=0,
            grid=(n_blocks,),
            in_specs=[
                pl.BlockSpec((tile_r, LANES), lambda i: (i, 0)),
                pl.BlockSpec((tile_r, LANES), lambda i: (i, 0)),
            ],
            # The (8,128) partial-sum block stays resident across the whole
            # reduction grid (accumulator pattern).
            out_specs=pl.BlockSpec((8, LANES), lambda i: (0, 0)),
        ),
        compiler_params=pltpu.CompilerParams(
            dimension_semantics=("arbitrary",),
            vmem_limit_bytes=48 * 1024 * 1024,
        ),
    )(x2, y2)

    # Tiny final cross-lane reduce + mean + scaler outside the kernel.
    return jnp.sum(partials) * (float(scaler) / float(total))


def _reference(map_x, map_s_gt, scaler=0.5):
    # Matches torch.nn.functional.binary_cross_entropy(sigmoid(x), y) * scaler.
    p = jax.nn.sigmoid(map_x.astype(jnp.float32))
    y = map_s_gt.astype(jnp.float32)
    log_p = jnp.maximum(jnp.log(p), -100.0)
    log_1mp = jnp.maximum(jnp.log1p(-p), -100.0)
    return jnp.mean(-(y * log_p + (1.0 - y) * log_1mp)) * scaler


if __name__ == "__main__":
    key = jax.random.PRNGKey(0)
    ks = jax.random.split(key, 8)

    def check(x, y, **kw):
        out = jax.block_until_ready(map_cross_entropy_loss(x, y, **kw))
        ref = _reference(x, y)
        assert jnp.allclose(out, ref, rtol=1e-4, atol=1e-6), (out, ref)

    # Primary small test (module-typical NCHW): batch=2, channels=4, 16x16.
    # Default path is the fused-jnp fast path.
    x_s = jax.random.normal(ks[0], (2, 4, 16, 16), dtype=jnp.float32)
    y_s = jax.random.uniform(ks[1], (2, 4, 16, 16), dtype=jnp.float32)
    check(x_s, y_s)
    # Same small shape, forcing the Pallas kernel (single block, no mask).
    check(x_s, y_s, min_pallas_elems=0)

    # Ragged shape on the kernel path: exercises the partial edge block,
    # the <=127-element lane pad, and the pl.when-gated tail mask.
    x_r = jax.random.normal(ks[2], (3, 5, 17, 300), dtype=jnp.float32)
    y_r = jax.random.uniform(ks[3], (3, 5, 17, 300), dtype=jnp.float32)
    check(x_r, y_r)

    # Larger shape: multiple 4096-row blocks accumulated into the resident
    # (8,128) vector accumulator.
    x_b = jax.random.normal(ks[4], (2, 4, 256, 512), dtype=jnp.float32)
    y_b = jax.random.uniform(ks[5], (2, 4, 256, 512), dtype=jnp.float32)
    check(x_b, y_b)

    print("KERNEL_OK")
</pallas_src>

<mosaic_0001>
module attributes {stable_mosaic.version = 11 : i64} {
  func.func @_bce_sum_kernel(%arg0: i32, %arg1: memref<16x128xf32, #tpu.memory_space<vmem>>, %arg2: memref<16x128xf32, #tpu.memory_space<vmem>>, %arg3: memref<8x128xf32, #tpu.memory_space<vmem>>) attributes {dimension_semantics = [#tpu.dimension_semantics<arbitrary>], iteration_bounds = array<i64: 1>, scalar_prefetch = 0 : i64, scratch_operands = 0 : i64, tpu.core_type = #tpu.core_type<tc>, window_params = [{transform_indices = @transform_0, window_bounds = array<i64: 16, 128>}, {transform_indices = @transform_1, window_bounds = array<i64: 16, 128>}, {pipeline_mode = #tpu.pipeline_mode<synchronous>, transform_indices = @transform_2, window_bounds = array<i64: 8, 128>}]} {
    %c0_i32 = arith.constant 0 : i32
    %0 = arith.cmpi eq, %arg0, %c0_i32 : i32
    %1 = arith.extui %0 : i1 to i32
    %c0_i32_0 = arith.constant 0 : i32
    %2 = arith.cmpi ne, %1, %c0_i32_0 : i32
    scf.if %2 {
      %cst_12 = arith.constant 0.000000e+00 : f32
      %27 = vector.broadcast %cst_12 : f32 to vector<8x128xf32>
      %c0_13 = arith.constant 0 : index
      %c0_14 = arith.constant 0 : index
      %28 = vector.load %arg3[%c0_13, %c0_14] : memref<8x128xf32, #tpu.memory_space<vmem>>, vector<8x128xf32>
      tpu.vector_store %arg3[%c0_13, %c0_14], %27 {strides = array<i32>} : memref<8x128xf32, #tpu.memory_space<vmem>>, vector<8x128xf32>,
    } else {
    }
    %c0 = arith.constant 0 : index
    %c0_1 = arith.constant 0 : index
    %3 = vector.load %arg1[%c0, %c0_1] : memref<16x128xf32, #tpu.memory_space<vmem>>, vector<16x128xf32>
    %c0_2 = arith.constant 0 : index
    %c0_3 = arith.constant 0 : index
    %4 = vector.load %arg2[%c0_2, %c0_3] : memref<16x128xf32, #tpu.memory_space<vmem>>, vector<16x128xf32>
    %5 = math.absf %3 : vector<16x128xf32>
    %cst = arith.constant 0.000000e+00 : f32
    %6 = vector.broadcast %cst : f32 to vector<16x128xf32>
    %7 = arith.subf %6, %5 : vector<16x128xf32>
    %8 = math.exp %7 : vector<16x128xf32>
    %9 = math.log1p %8 : vector<16x128xf32>
    %cst_4 = arith.constant 0.000000e+00 : f32
    %10 = vector.broadcast %cst_4 : f32 to vector<16x128xf32>
    %11 = arith.maximumf %3, %10 : vector<16x128xf32>
    %12 = arith.addf %11, %9 : vector<16x128xf32>
    %cst_5 = arith.constant 1.000000e+02 : f32
    %13 = vector.broadcast %cst_5 : f32 to vector<16x128xf32>
    %14 = arith.minimumf %12, %13 : vector<16x128xf32>
    %15 = arith.subf %11, %3 : vector<16x128xf32>
    %16 = arith.addf %15, %9 : vector<16x128xf32>
    %cst_6 = arith.constant 1.000000e+02 : f32
    %17 = vector.broadcast %cst_6 : f32 to vector<16x128xf32>
    %18 = arith.minimumf %16, %17 : vector<16x128xf32>
    %19 = arith.subf %18, %14 : vector<16x128xf32>
    %20 = arith.mulf %4, %19 : vector<16x128xf32>
    %21 = arith.addf %14, %20 : vector<16x128xf32>
    %c0_7 = arith.constant 0 : index
    %c0_8 = arith.constant 0 : index
    %22 = vector.load %arg3[%c0_7, %c0_8] : memref<8x128xf32, #tpu.memory_space<vmem>>, vector<8x128xf32>
    %23 = vector.shape_cast %21 : vector<16x128xf32> to vector<2x8x128xf32>
    %cst_9 = arith.constant dense<0.000000e+00> : vector<8x128xf32>
    %24 = vector.multi_reduction <add>, %23, %cst_9 [0] : vector<2x8x128xf32> to vector<8x128xf32>
    %25 = arith.addf %22, %24 : vector<8x128xf32>
    %c0_10 = arith.constant 0 : index
    %c0_11 = arith.constant 0 : index
    %26 = vector.load %arg3[%c0_10, %c0_11] : memref<8x128xf32, #tpu.memory_space<vmem>>, vector<8x128xf32>
    tpu.vector_store %arg3[%c0_10, %c0_11], %25 {strides = array<i32>} : memref<8x128xf32, #tpu.memory_space<vmem>>, vector<8x128xf32>,
    return
  }
  func.func @transform_0(%arg0: i32) -> (i32, i32) {
    %c0_i32 = arith.constant 0 : i32
    %c0_i32_0 = arith.constant 0 : i32
    return %arg0, %c0_i32 : i32, i32
  }
  func.func @transform_1(%arg0: i32) -> (i32, i32) {
    %c0_i32 = arith.constant 0 : i32
    %c0_i32_0 = arith.constant 0 : i32
    return %arg0, %c0_i32 : i32, i32
  }
  func.func @transform_2(%arg0: i32) -> (i32, i32) {
    %c0_i32 = arith.constant 0 : i32
    %c0_i32_0 = arith.constant 0 : i32
    %c0_i32_1 = arith.constant 0 : i32
    return %c0_i32, %c0_i32_0 : i32, i32
  }
}

</mosaic_0001>

<llo_original>
// kernel: tpu_custom_call.1
$region0: #{tpu_custom_call.1}
  #allocation0 [shape = 'u32[]', space=smem, size = 0x4, offset = 0x4, fixed_abs, tag = 'smem constant byte address 0x4 - core index']
  #allocation1 [shape = 'u32[144,128]{1,0:T(1,128)}', space=vmem, size = 0x12000, scoped, tag = 'internal scratch']
  %s0 = inlined_call_operand.hbm [shape: f32[16,128], index: 0, kind: input, shape index: {}]
  %s1 = inlined_call_operand.hbm [shape: f32[16,128], index: 1, kind: input, shape index: {}]
  %s2 = inlined_call_operand.hbm [shape: f32[8,128], index: 2, kind: output, shape index: {}]
  %s3 = sld [smem:[#allocation0]]
  $region30: #{tpu_custom_call.1} parent=0
    _
  %s5 = ssub.s32 1, %s3
  %s6 = scalar_select 0, %s5, %s3
  $region1: #{tpu_custom_call.1} parent=0
    #allocation2 [shape = 'u8[8192]{0}', space=vmem, size = 0x2000, scoped, tag = 'input window, operand 0, single buffered']
    #allocation3 [shape = 's32[1]{0}', space=sflag, size = 0x4, scoped, tag = 'scoped memory for tpu_custom_call.1']
    #allocation4 [shape = 's32[1]{0}', space=sflag, size = 0x4, scoped, tag = 'scoped memory for tpu_custom_call.1']
    #allocation5 [shape = 'u8[8192]{0}', space=vmem, size = 0x2000, scoped, tag = 'input window, operand 1, single buffered']
    #allocation6 [shape = 's32[1]{0}', space=sflag, size = 0x4, scoped, tag = 'scoped memory for tpu_custom_call.1']
    #allocation7 [shape = 'u8[4096]{0}', space=vmem, size = 0x1000, scoped, tag = 'output window, operand 0, single buffered']
    %7 = vsyncpa [#allocation3], 0
    %8 = vsyncpa [#allocation6], 0
    %9 = vsyncpa [#allocation4], 0
    // Predicated region
    $region2: #{tpu_custom_call.1} parent=1 // pred_check
      _
    $region3: #{tpu_custom_call.1} parent=1 // pred_check_branch
      %11 = sbr.rel (0) target = $region5
    $region4: #{tpu_custom_call.1} parent=1 // pred_region
      %s13 = ssub.s32 256, 256
      %14 = vsyncadd [#allocation3], %s13
      %s15 = sshll.u32 [#allocation2], 4
      %s16 = int_to_ptr.vmem [resolvable:$true] %s15
      %21 = dma.hbm_to_vmem [thread:$0]  %s0, 256, %s16, [#allocation3], 128, 128, 8
    $region5: #{tpu_custom_call.1} parent=1 // pred_fallthru
      _
    // Predicated region
    $region6: #{tpu_custom_call.1} parent=1 // pred_check
      _
    $region7: #{tpu_custom_call.1} parent=1 // pred_check_branch
      %23 = sbr.rel (0) target = $region9
    $region8: #{tpu_custom_call.1} parent=1 // pred_region
      %s25 = ssub.s32 256, 256
      %26 = vsyncadd [#allocation6], %s25
      %s27 = sshll.u32 [#allocation5], 4
      %s28 = int_to_ptr.vmem [resolvable:$true] %s27
      %33 = dma.hbm_to_vmem [thread:$0]  %s1, 256, %s28, [#allocation6], 128, 128, 8
    $region9: #{tpu_custom_call.1} parent=1 // pred_fallthru
      _
    // Predicated region
    $region10: #{tpu_custom_call.1} parent=1 // pred_check
      _
    $region11: #{tpu_custom_call.1} parent=1 // pred_check_branch
      %35 = sbr.rel (0) target = $region13
    $region12: #{tpu_custom_call.1} parent=1 // pred_region
      %36 = dma.done [#allocation3], 256
    $region13: #{tpu_custom_call.1} parent=1 // pred_fallthru
      _
    // Predicated region
    $region14: #{tpu_custom_call.1} parent=1 // pred_check
      _
    $region15: #{tpu_custom_call.1} parent=1 // pred_check_branch
      %38 = sbr.rel (0) target = $region17
    $region16: #{tpu_custom_call.1} parent=1 // pred_region
      %39 = dma.done [#allocation6], 256
    $region17: #{tpu_custom_call.1} parent=1 // pred_fallthru
      _
    %p40 = scmp.eq.s32.totalorder 0, 0
    // Predicated region
    $region18: #{tpu_custom_call.1} parent=1 // pred_check
      %p41 = pneg %p40
    $region19: #{tpu_custom_call.1} parent=1 // pred_check_branch
      %43 = sbr.rel (%p41) target = $region21
    $region20: #{tpu_custom_call.1} parent=1 // pred_region
      %44 = vst [vmem:[#allocation7] sm:$0xff] 0.0
    $region21: #{tpu_custom_call.1} parent=1 // pred_fallthru
      _
    %v45 = vld [vmem:[#allocation2] sm:$0xff]
    %v46 = vld [vmem:[#allocation2 + $0x8] sm:$0xff]
    %v47 = vld [vmem:[#allocation5] sm:$0xff]
    %v48 = vld [vmem:[#allocation5 + $0x8] sm:$0xff]
    %v49 = vand.u32 2147483647, %v45
    %v50 = vand.u32 2147483647, %v46
    %v51 = vsub.f32 0.0, %v49
    %v52 = vsub.f32 0.0, %v50
    %v53 = vmul.f32 %v51, 1.442695
    %v54 = vpow.pop %v53
    %v55 = vmul.f32 %v52, 1.442695
    %v56 = vpow.pop %v55
    %v57 = vadd.f32 %v54, 1.0
    %v58 = vlog2.pop %v57
    %v59 = vmul.f32 %v58, 0.6931472
    %v60 = vmul.f32 -0.5, %v54
    %v61 = vadd.f32 %v60, 1.0
    %v62 = vmul.f32 %v61, %v54
    %v63 = vand.u32 2147483647, %v54
    %vm64 = vcmp.lt.f32.partialorder %v63, 0.0004427343
    %v65 = vsel %vm64, %v62, %v59
    %v66 = vadd.f32 %v56, 1.0
    %v67 = vlog2.pop %v66
    %v68 = vmul.f32 %v67, 0.6931472
    %v69 = vmul.f32 -0.5, %v56
    %v70 = vadd.f32 %v69, 1.0
    %v71 = vmul.f32 %v70, %v56
    %v72 = vand.u32 2147483647, %v56
    %vm73 = vcmp.lt.f32.partialorder %v72, 0.0004427343
    %v74 = vsel %vm73, %v71, %v68
    %v75 = vmax.f32 %v45, 0.0
    %v76 = vmax.f32 %v46, 0.0
    %v77 = vadd.f32 %v75, %v65
    %v78 = vadd.f32 %v76, %v74
    %v79 = vmin.f32 %v77, 100.0
    %v80 = vmin.f32 %v78, 100.0
    %v81 = vsub.f32 %v75, %v45
    %v82 = vsub.f32 %v76, %v46
    %v83 = vadd.f32 %v81, %v65
    %v84 = vadd.f32 %v82, %v74
    %v85 = vmin.f32 %v83, 100.0
    %v86 = vmin.f32 %v84, 100.0
    %v87 = vsub.f32 %v85, %v79
    %v88 = vsub.f32 %v86, %v80
    %v89 = vmul.f32 %v47, %v87
    %v90 = vmul.f32 %v48, %v88
    %v91 = vadd.f32 %v79, %v89
    %v92 = vadd.f32 %v80, %v90
    %v93 = vld [vmem:[#allocation7] sm:$0xff]
    %v94 = vadd.f32 %v91, %v92
    %v95 = vadd.f32 %v93, %v94
    %96 = vst [vmem:[#allocation7] sm:$0xff] %v95
    // Predicated region
    $region22: #{tpu_custom_call.1} parent=1 // pred_check
      _
    $region23: #{tpu_custom_call.1} parent=1 // pred_check_branch
      %98 = sbr.rel (0) target = $region25
    $region24: #{tpu_custom_call.1} parent=1 // pred_region
      %s100 = ssub.s32 128, 128
      %101 = vsyncadd [#allocation4], %s100
      %s103 = sshll.u32 [#allocation7], 4
      %s104 = int_to_ptr.vmem [resolvable:$true] %s103
      %106 = dma.vmem_to_hbm [thread:$0]  %s104, 128, %s2, [#allocation4]
    $region25: #{tpu_custom_call.1} parent=1 // pred_fallthru
      _
    // Predicated region
    $region26: #{tpu_custom_call.1} parent=1 // pred_check
      _
    $region27: #{tpu_custom_call.1} parent=1 // pred_check_branch
      %108 = sbr.rel (0) target = $region29
    $region28: #{tpu_custom_call.1} parent=1 // pred_region
      %109 = dma.done [#allocation4], 128
    $region29: #{tpu_custom_call.1} parent=1 // pred_fallthru
      _
    %110 = vsyncpa [#allocation3], 1
    %111 = vsyncpa [#allocation6], 1
    %112 = vsyncpa [#allocation4], 1

</llo_original>
